<compile_context>
chip_gen: v7x
topology: tpu7x:2x2x1
jax: 0.10.0
libtpu: 0.0.40
codegen_flags: <defaults>
</compile_context>

<pallas_src>
import jax
import jax.numpy as jnp
from jax.experimental import pallas as pl
from jax.experimental.pallas import tpu as pltpu


# ----------------------------------------------------------------------------- matmul + bias
def _matmul_bias_kernel(x_ref, w_ref, b_ref, o_ref, acc_ref):
    @pl.when(pl.program_id(2) == 0)
    def _():
        acc_ref[...] = jnp.zeros_like(acc_ref)

    acc_ref[...] += jnp.dot(x_ref[...], w_ref[...],
                            preferred_element_type=jnp.float32)

    @pl.when(pl.program_id(2) == pl.num_programs(2) - 1)
    def _():
        o_ref[...] = (acc_ref[...] + b_ref[...].astype(jnp.float32)).astype(o_ref.dtype)


def _pick_tile(n, candidates):
    for c in candidates:
        if n % c == 0:
            return c
    return n


def matmul_bias(x, w, b):
    """out = x @ w + b, tiled Pallas matmul with f32 VMEM accumulator."""
    M, K = x.shape
    K2, N = w.shape
    assert K == K2 and b.shape == (N,)
    tm = _pick_tile(M, (256, 128))
    tn = _pick_tile(N, (256, 128))
    tk = _pick_tile(K, (512, 256, 128))
    grid = (M // tm, N // tn, K // tk)
    return pl.pallas_call(
        _matmul_bias_kernel,
        out_shape=jax.ShapeDtypeStruct((M, N), x.dtype),
        grid_spec=pltpu.PrefetchScalarGridSpec(
            num_scalar_prefetch=0,
            grid=grid,
            in_specs=[
                pl.BlockSpec((tm, tk), lambda i, j, k: (i, k)),
                pl.BlockSpec((tk, tn), lambda i, j, k: (k, j)),
                pl.BlockSpec((1, tn), lambda i, j, k: (0, j)),
            ],
            out_specs=pl.BlockSpec((tm, tn), lambda i, j, k: (i, j)),
            scratch_shapes=[pltpu.VMEM((tm, tn), jnp.float32)],
        ),
        compiler_params=pltpu.CompilerParams(
            dimension_semantics=("parallel", "parallel", "arbitrary")),
    )(x, w, b.reshape(1, N))


# --------------------------------------------------------------- fused RoPE + GQA attention
def _rope_attn_kernel(q_ref, k_ref, v_ref, cos_ref, sin_ref, o_ref):
    # q_ref/k_ref/v_ref: (1, S, d) per-head tiles sliced out of the fused qkv buffer.
    # cos_ref: cos(pos*theta_{j//2});  sin_ref: (+/-)sin(...) with the sign of the
    # interleaved-pair rotation already folded in (-sin on even lanes, +sin on odd lanes).
    _, S, d = q_ref.shape
    f32 = jnp.float32
    q = q_ref[0].astype(f32)          # (S, d)
    k = k_ref[0].astype(f32)
    v = v_ref[0].astype(f32)
    c = cos_ref[...]
    s = sin_ref[...]

    lane = jax.lax.broadcasted_iota(jnp.int32, (S, d), 1)
    is_even = (lane % 2) == 0

    def rope(x):
        # out[2i]   = x[2i]*cos_i - x[2i+1]*sin_i
        # out[2i+1] = x[2i]*sin_i + x[2i+1]*cos_i
        # pair-swap via two lane rotations (XLU) + a select; pairs never cross head edges.
        x_next = pltpu.roll(x, d - 1, axis=1)   # x[(j + 1) % d]
        x_prev = pltpu.roll(x, 1, axis=1)       # x[(j - 1) % d]
        x_pair = jnp.where(is_even, x_next, x_prev)
        return x * c + x_pair * s

    qr = rope(q)
    kr = rope(k)

    scale = float(d) ** -0.5
    scores = jax.lax.dot_general(                      # (S, S) = Qrot @ Krot^T
        qr, kr, dimension_numbers=(((1,), (1,)), ((), ())),
        preferred_element_type=f32) * scale

    m = jnp.max(scores, axis=-1, keepdims=True)
    p = jnp.exp(scores - m)
    l = jnp.sum(p, axis=-1, keepdims=True)
    attn = p / l
    # TODO(synk): nn.Dropout(0.2) on the scores is a training-time op; eval forward = identity.

    out = jnp.dot(attn, v, preferred_element_type=f32)  # (S, d)
    o_ref[0] = out.astype(o_ref.dtype)


# ------------------------------------------------------------------------------ full forward
def gpa_self_attention_forward(x, w_qkv, b_qkv, w_o, b_o, *,
                               n_heads, n_kv_heads, start_pos=0):
    B, S, dim = x.shape
    Hq, Hkv = n_heads, n_kv_heads
    dq, dkv = dim // Hq, dim // Hkv          # module formulas: dq = dim/h_q, dkv = dim/h_kv
    n_rep = Hq // Hkv
    Nq, Nkv = Hq * dq, Hkv * dkv
    assert dq == dkv, "QK^T needs matching head dims (the module is consistent when h_kv == h_q)"
    assert dq % 128 == 0 and S % 8 == 0, "keep per-head blocks lane/sublane aligned"

    # 1) fused QKV projection: one lane-dense MXU pass over x.
    qkv = matmul_bias(x.reshape(B * S, dim), w_qkv, b_qkv)      # (B*S, Nq + 2*Nkv)

    # 2) RoPE tables (tiny, (S, dq), lane-dense, grid-invariant -> stay resident in VMEM).
    #    Like RoPe._build_cache, positions are 0..S-1 (start_pos not used).
    theta = 1.0 / (10000.0 ** (jnp.arange(0, dq, 2, dtype=jnp.float32) / dq))   # (dq/2,)
    ang = jnp.arange(S, dtype=jnp.float32)[:, None] * theta[None, :]            # (S, dq/2)
    cos_t = jnp.repeat(jnp.cos(ang), 2, axis=1)                                 # (S, dq)
    sign = jnp.where(jnp.arange(dq) % 2 == 0, -1.0, 1.0).astype(jnp.float32)
    sin_t = jnp.repeat(jnp.sin(ang), 2, axis=1) * sign[None, :]                 # (S, dq)

    # TODO(synk): cache_k/cache_v in-place writes are side effects the original forward never
    # reads back for this output (it attends with the fresh q,k,v); omitted here.

    qkv3 = qkv.reshape(B, S, Nq + 2 * Nkv)   # leading-dim reshape only (no copy)
    kv_blk0 = Nq // dkv                      # block offset of the K region
    v_blk0 = (Nq + Nkv) // dkv               # block offset of the V region

    attn = pl.pallas_call(
        _rope_attn_kernel,
        out_shape=jax.ShapeDtypeStruct((B, S, Nq), x.dtype),
        grid_spec=pltpu.PrefetchScalarGridSpec(
            num_scalar_prefetch=0,
            grid=(B, Hq),
            in_specs=[
                # q / k / v tiles read straight out of the fused qkv buffer:
                pl.BlockSpec((1, S, dq), lambda b, h: (b, 0, h)),
                pl.BlockSpec((1, S, dkv), lambda b, h: (b, 0, kv_blk0 + h // n_rep)),
                pl.BlockSpec((1, S, dkv), lambda b, h: (b, 0, v_blk0 + h // n_rep)),
                pl.BlockSpec((S, dq), lambda b, h: (0, 0)),
                pl.BlockSpec((S, dq), lambda b, h: (0, 0)),
            ],
            out_specs=pl.BlockSpec((1, S, dq), lambda b, h: (b, 0, h)),
        ),
        compiler_params=pltpu.CompilerParams(
            dimension_semantics=("parallel", "parallel")),
    )(qkv3, qkv3, qkv3, cos_t, sin_t)

    # 3) output projection.
    out = matmul_bias(attn.reshape(B * S, Nq), w_o, b_o)
    return out.reshape(B, S, dim)


# ---------------------------------------------------------------------------- pure-JAX check
def reference_forward(x, w_qkv, b_qkv, w_o, b_o, n_heads, n_kv_heads):
    B, S, dim = x.shape
    Hq, Hkv = n_heads, n_kv_heads
    dq, dkv = dim // Hq, dim // Hkv
    n_rep = Hq // Hkv
    Nq, Nkv = Hq * dq, Hkv * dkv
    hp = jax.lax.Precision.HIGHEST

    def rope(t):  # (B, S, H, d), interleaved-pair (view_as_complex) semantics
        d = t.shape[-1]
        theta = 1.0 / (10000.0 ** (jnp.arange(0, d, 2, dtype=jnp.float32) / d))
        ang = jnp.arange(S, dtype=jnp.float32)[:, None] * theta[None, :]
        c = jnp.cos(ang)[None, :, None, :]
        s = jnp.sin(ang)[None, :, None, :]
        te, to = t[..., 0::2], t[..., 1::2]
        oe = te * c - to * s
        oo = te * s + to * c
        return jnp.stack([oe, oo], axis=-1).reshape(t.shape)

    xf = x.reshape(B * S, dim).astype(jnp.float32)
    qkv = jnp.dot(xf, w_qkv, precision=hp) + b_qkv
    q = qkv[:, :Nq].reshape(B, S, Hq, dq)
    k = qkv[:, Nq:Nq + Nkv].reshape(B, S, Hkv, dkv)
    v = qkv[:, Nq + Nkv:].reshape(B, S, Hkv, dkv)
    q, k = rope(q), rope(k)
    k = jnp.repeat(k, n_rep, axis=2)
    v = jnp.repeat(v, n_rep, axis=2)
    scores = jnp.einsum('bqhd,bkhd->bhqk', q, k, precision=hp) * (dq ** -0.5)
    p = jax.nn.softmax(scores, axis=-1)
    o = jnp.einsum('bhqk,bkhd->bqhd', p, v, precision=hp).reshape(B * S, Nq)
    out = jnp.dot(o, w_o, precision=hp) + b_o
    return out.reshape(B, S, dim).astype(x.dtype)


if __name__ == "__main__":
    # Small shapes implied by the module, kept TPU-friendly: d_model=256, n_heads=2
    # -> head_dim = 128 (lane-dense per-head tiles), seq=128, batch=2.
    # n_kv_heads follows the ModelArgs default (None -> n_heads); the module's dkv = dim/h_kv
    # formula only yields a consistent (dq == dkv) attention in that case.
    B, S, dim = 2, 128, 256
    n_heads, n_kv_heads = 2, 2
    Hq, Hkv = n_heads, n_kv_heads
    dq, dkv = dim // Hq, dim // Hkv
    Nq, Nkv = Hq * dq, Hkv * dkv

    key = jax.random.PRNGKey(0)
    kx, kq, kk, kv, ko, kb1, kb2 = jax.random.split(key, 7)
    x = jax.random.normal(kx, (B, S, dim), jnp.float32)
    s_in = dim ** -0.5
    w_q = jax.random.normal(kq, (dim, Nq), jnp.float32) * s_in
    w_k = jax.random.normal(kk, (dim, Nkv), jnp.float32) * s_in
    w_v = jax.random.normal(kv, (dim, Nkv), jnp.float32) * s_in
    w_qkv = jnp.concatenate([w_q, w_k, w_v], axis=1)           # (dim, Nq + 2*Nkv)
    b_qkv = jax.random.normal(kb1, (Nq + 2 * Nkv,), jnp.float32) * 0.02
    w_o = jax.random.normal(ko, (Nq, dim), jnp.float32) * (Nq ** -0.5)
    b_o = jax.random.normal(kb2, (dim,), jnp.float32) * 0.02

    out = gpa_self_attention_forward(x, w_qkv, b_qkv, w_o, b_o,
                                     n_heads=Hq, n_kv_heads=Hkv, start_pos=0)
    out = jax.block_until_ready(out)

    ref = reference_forward(x, w_qkv, b_qkv, w_o, b_o, Hq, Hkv)
    assert out.shape == x.shape and out.dtype == x.dtype
    # Tolerance covers the TPU's default (reduced-precision) f32 MXU path inside the kernels
    # vs. the HIGHEST-precision pure-JAX reference; structural errors are orders larger.
    assert jnp.allclose(out, ref, atol=2e-2, rtol=2e-2)
    print("KERNEL_OK")
</pallas_src>

<mosaic_0001>
module attributes {stable_mosaic.version = 11 : i64} {
  func.func @_matmul_bias_kernel(%arg0: i32, %arg1: i32, %arg2: i32, %arg3: memref<256x256xf32, #tpu.memory_space<vmem>>, %arg4: memref<256x256xf32, #tpu.memory_space<vmem>>, %arg5: memref<1x256xf32, #tpu.memory_space<vmem>>, %arg6: memref<256x256xf32, #tpu.memory_space<vmem>>, %arg7: memref<256x256xf32, #tpu.memory_space<vmem>>) attributes {dimension_semantics = [#tpu.dimension_semantics<parallel>, #tpu.dimension_semantics<parallel>, #tpu.dimension_semantics<arbitrary>], iteration_bounds = array<i64: 1, 3, 1>, scalar_prefetch = 0 : i64, scratch_operands = 1 : i64, tpu.core_type = #tpu.core_type<tc>, window_params = [{transform_indices = @transform_0, window_bounds = array<i64: 256, 256>}, {transform_indices = @transform_1, window_bounds = array<i64: 256, 256>}, {transform_indices = @transform_2, window_bounds = array<i64: 1, 256>}, {transform_indices = @transform_3, window_bounds = array<i64: 256, 256>}]} {
    %c0_i32 = arith.constant 0 : i32
    %0 = arith.cmpi eq, %arg2, %c0_i32 : i32
    %1 = arith.extui %0 : i1 to i32
    %c0_i32_0 = arith.constant 0 : i32
    %2 = arith.cmpi ne, %1, %c0_i32_0 : i32
    scf.if %2 {
      %cst_10 = arith.constant 0.000000e+00 : f32
      %12 = vector.broadcast %cst_10 : f32 to vector<256x256xf32>
      %c0_11 = arith.constant 0 : index
      %c0_12 = arith.constant 0 : index
      %13 = vector.load %arg7[%c0_11, %c0_12] : memref<256x256xf32, #tpu.memory_space<vmem>>, vector<256x256xf32>
      tpu.vector_store %arg7[%c0_11, %c0_12], %12 {strides = array<i32>} : memref<256x256xf32, #tpu.memory_space<vmem>>, vector<256x256xf32>,
    } else {
    }
    %c0 = arith.constant 0 : index
    %c0_1 = arith.constant 0 : index
    %3 = vector.load %arg7[%c0, %c0_1] : memref<256x256xf32, #tpu.memory_space<vmem>>, vector<256x256xf32>
    %c0_2 = arith.constant 0 : index
    %c0_3 = arith.constant 0 : index
    %4 = vector.load %arg3[%c0_2, %c0_3] : memref<256x256xf32, #tpu.memory_space<vmem>>, vector<256x256xf32>
    %c0_4 = arith.constant 0 : index
    %c0_5 = arith.constant 0 : index
    %5 = vector.load %arg4[%c0_4, %c0_5] : memref<256x256xf32, #tpu.memory_space<vmem>>, vector<256x256xf32>
    %cst = arith.constant dense<0.000000e+00> : vector<256x256xf32>
    %6 = tpu.matmul %4, %5, %cst {dimension_numbers = #tpu.dot_dimension_numbers<[1], [0], [0], [1], [0, 0, 1, 1], [], []>} : vector<256x256xf32>, vector<256x256xf32>, vector<256x256xf32> -> vector<256x256xf32>
    %7 = arith.addf %3, %6 : vector<256x256xf32>
    %c0_6 = arith.constant 0 : index
    %c0_7 = arith.constant 0 : index
    %8 = vector.load %arg7[%c0_6, %c0_7] : memref<256x256xf32, #tpu.memory_space<vmem>>, vector<256x256xf32>
    tpu.vector_store %arg7[%c0_6, %c0_7], %7 {strides = array<i32>} : memref<256x256xf32, #tpu.memory_space<vmem>>, vector<256x256xf32>,
    %c0_i32_8 = arith.constant 0 : i32
    %9 = arith.cmpi eq, %arg2, %c0_i32_8 : i32
    %10 = arith.extui %9 : i1 to i32
    %c0_i32_9 = arith.constant 0 : i32
    %11 = arith.cmpi ne, %10, %c0_i32_9 : i32
    scf.if %11 {
      %c0_10 = arith.constant 0 : index
      %c0_11 = arith.constant 0 : index
      %12 = vector.load %arg7[%c0_10, %c0_11] : memref<256x256xf32, #tpu.memory_space<vmem>>, vector<256x256xf32>
      %c0_12 = arith.constant 0 : index
      %c0_13 = arith.constant 0 : index
      %13 = vector.load %arg5[%c0_12, %c0_13] : memref<1x256xf32, #tpu.memory_space<vmem>>, vector<1x256xf32>
      %14 = vector.broadcast %13 : vector<1x256xf32> to vector<256x256xf32>
      %15 = arith.addf %12, %14 : vector<256x256xf32>
      %c0_14 = arith.constant 0 : index
      %c0_15 = arith.constant 0 : index
      %16 = vector.load %arg6[%c0_14, %c0_15] : memref<256x256xf32, #tpu.memory_space<vmem>>, vector<256x256xf32>
      tpu.vector_store %arg6[%c0_14, %c0_15], %15 {strides = array<i32>} : memref<256x256xf32, #tpu.memory_space<vmem>>, vector<256x256xf32>,
    } else {
    }
    return
  }
  func.func @transform_0(%arg0: i32, %arg1: i32, %arg2: i32) -> (i32, i32) {
    %c0_i32 = arith.constant 0 : i32
    return %arg0, %arg2 : i32, i32
  }
  func.func @transform_1(%arg0: i32, %arg1: i32, %arg2: i32) -> (i32, i32) {
    %c0_i32 = arith.constant 0 : i32
    return %arg2, %arg1 : i32, i32
  }
  func.func @transform_2(%arg0: i32, %arg1: i32, %arg2: i32) -> (i32, i32) {
    %c0_i32 = arith.constant 0 : i32
    %c0_i32_0 = arith.constant 0 : i32
    return %c0_i32, %arg1 : i32, i32
  }
  func.func @transform_3(%arg0: i32, %arg1: i32, %arg2: i32) -> (i32, i32) {
    %c0_i32 = arith.constant 0 : i32
    return %arg0, %arg1 : i32, i32
  }
}

</mosaic_0001>

<llo_original>
// kernel: tpu_custom_call.1
$region0: #{tpu_custom_call.1}
  #allocation0 [shape = 'u32[]', space=smem, size = 0x4, offset = 0x4, fixed_abs, tag = 'smem constant byte address 0x4 - core index']
  #allocation1 [shape = 'u32[144,128]{1,0:T(1,128)}', space=vmem, size = 0x12000, scoped, tag = 'internal scratch']
  #allocation2 [shape = 'f32[256,256]{1,0:T(8,128)}', space=vmem, size = 0x40000, scoped, tag = 'scratch operand']
  %s0 = inlined_call_operand.hbm [shape: f32[256,256], index: 0, kind: input, shape index: {}]
  %s1 = inlined_call_operand.hbm [shape: f32[256,768], index: 1, kind: input, shape index: {}]
  %s2 = inlined_call_operand.vmem [shape: f32[1,768], index: 2, kind: input, shape index: {}]
  %s3 = inlined_call_operand.hbm [shape: f32[256,768], index: 3, kind: output, shape index: {}]
  %s4 = sld [smem:[#allocation0]]
  $region61: #{tpu_custom_call.1} parent=0
    _
  %s6 = ssub.s32 1, %s4
  %s7 = scalar_select 0, %s6, %s4
  $region1: #{tpu_custom_call.1} parent=0
    #allocation3 [shape = 'u8[262144]{0}', space=vmem, size = 0x40000, scoped, tag = 'input window, operand 0, single buffered']
    #allocation4 [shape = 's32[2]{0}', space=sflag, size = 0x8, scoped, tag = 'scoped memory for tpu_custom_call.1']
    #allocation5 [shape = 's32[2]{0}', space=sflag, size = 0x8, scoped, tag = 'scoped memory for tpu_custom_call.1']
    #allocation6 [shape = 'u8[524288]{0}', space=vmem, size = 0x80000, scoped, tag = 'input window, operand 1']
    #allocation7 [shape = 's32[2]{0}', space=sflag, size = 0x8, scoped, tag = 'scoped memory for tpu_custom_call.1']
    #allocation8 [shape = 'u8[524288]{0}', space=vmem, size = 0x80000, scoped, tag = 'output window, operand 0']
    %8 = vsyncpa [#allocation4], 0
    %9 = vsyncpa [#allocation7], 0
    %s10 = scalar_lea.sflag [#allocation7], 1
    %11 = vsyncpa %s10, 0
    %12 = vsyncpa [#allocation5], 0
    %s13 = scalar_lea.sflag [#allocation5], 1
    %14 = vsyncpa %s13, 0
    loop: start=0, step=1, limit=5
    $region2: #{tpu_custom_call.1} parent=1 // loop_pre_header
      _
    $region3: #{tpu_custom_call.1} parent=1 // loop_header
      %s16 = sphi 0, %s20
      %p17 = scmp.ge.s32.totalorder %s16, 5
      %s23 = sphi 0, %s42
      %s24 = sphi 0, %s38
      %s25 = sphi 0, %s34
      %s26 = sphi 0, %s23
      %s27 = sphi 0, %s24
      %s28 = sphi 0, %s25
      %s29 = sphi 0, %s26
      %s30 = sphi 0, %s27
      %s31 = sphi 0, %s28
      %s47 = sphi 0, %s49
      %s50 = sphi 0, %s47
      %s51 = sphi 0, %s50
      %s67 = sphi 0, %s51
      %s75 = sphi 0, %s77
      %s78 = sphi 0, %s75
      %s79 = sphi 0, %s78
      %s95 = sphi 0, %s79
      %s101 = sphi 0, %s103
      %s104 = sphi 0, %s101
      %s105 = sphi 0, %s104
      %s121 = sphi 0, %s105
      %s129 = sphi 0, %s131
      %s132 = sphi 0, %s129
      %s133 = sphi 0, %s132
      %s149 = sphi 0, %s133
    $region4: #{tpu_custom_call.1} parent=1 // loop_header_branch
      %19 = sbr.rel (%p17) target = $region8
    $region5: #{tpu_custom_call.1} parent=1 // loop_body
      %s21 = ssub.s32 %s16, 1
      %s22 = ssub.s32 %s16, 2
      %s32 = sadd.s32 1, %s25
      %p33 = scmp.ge.s32.totalorder %s32, 1
      %s34 = scalar_select %p33, 0, %s32
      %s35 = sadd.s32 1, %s24
      %s36 = scalar_select %p33, %s35, %s24
      %p37 = scmp.ge.s32.totalorder %s36, 3
      %s38 = scalar_select %p37, 0, %s36
      %s39 = sadd.s32 1, %s23
      %s40 = scalar_select %p37, %s39, %s23
      %p41 = scmp.ge.s32.totalorder %s40, 1
      %s42 = scalar_select %p41, 0, %s40
      %s43 = ssub.s32 %s23, %s42
      %s44 = ssub.s32 %s25, %s34
      %s45 = sor.u32 %s43, %s44
      %p46 = scmp.eq.s32.totalorder %s45, 0
      %s48 = sadd.s32 %s47, 1
      %s49 = scalar_select %p46, %s47, %s48
      %p52 = pneg %p46
      %p53 = scmp.eq.s32.totalorder %s16, 2
      %p54 = por %p52, %p53
      %p55 = scmp.ne.s32.totalorder %s47, %s50
      %p56 = scmp.eq.s32.totalorder %s16, 0
      %p57 = por %p55, %p56
      %p58 = scmp.ne.s32.totalorder %s47, %s50
      %p59 = scmp.eq.s32.totalorder %s21, 2
      %p60 = por %p58, %p59
      %p61 = scmp.ne.s32.totalorder %s50, %s51
      %p62 = scmp.eq.s32.totalorder %s21, 0
      %p63 = por %p61, %p62
      %p64 = scmp.ne.s32.totalorder %s50, %s51
      %p65 = scmp.eq.s32.totalorder %s22, 2
      %p66 = por %p64, %p65
      %p68 = scmp.ne.s32.totalorder %s51, %s67
      %p69 = scmp.eq.s32.totalorder %s22, 0
      %p70 = por %p68, %p69
      %s71 = ssub.s32 %s25, %s34
      %s72 = ssub.s32 %s24, %s38
      %s73 = sor.u32 %s71, %s72
      %p74 = scmp.eq.s32.totalorder %s73, 0
      %s76 = sadd.s32 %s75, 1
      %s77 = scalar_select %p74, %s75, %s76
      %p80 = pneg %p74
      %p81 = scmp.eq.s32.totalorder %s16, 2
      %p82 = por %p80, %p81
      %p83 = scmp.ne.s32.totalorder %s75, %s78
      %p84 = scmp.eq.s32.totalorder %s16, 0
      %p85 = por %p83, %p84
      %p86 = scmp.ne.s32.totalorder %s75, %s78
      %p87 = scmp.eq.s32.totalorder %s21, 2
      %p88 = por %p86, %p87
      %p89 = scmp.ne.s32.totalorder %s78, %s79
      %p90 = scmp.eq.s32.totalorder %s21, 0
      %p91 = por %p89, %p90
      %p92 = scmp.ne.s32.totalorder %s78, %s79
      %p93 = scmp.eq.s32.totalorder %s22, 2
      %p94 = por %p92, %p93
      %p96 = scmp.ne.s32.totalorder %s79, %s95
      %p97 = scmp.eq.s32.totalorder %s22, 0
      %p98 = por %p96, %p97
      %s99 = ssub.s32 %s24, %s38
      %p100 = scmp.eq.s32.totalorder %s99, 0
      %s102 = sadd.s32 %s101, 1
      %s103 = scalar_select %p100, %s101, %s102
      %p106 = pneg %p100
      %p107 = scmp.eq.s32.totalorder %s16, 2
      %p108 = por %p106, %p107
      %p109 = scmp.ne.s32.totalorder %s101, %s104
      %p110 = scmp.eq.s32.totalorder %s16, 0
      %p111 = por %p109, %p110
      %p112 = scmp.ne.s32.totalorder %s101, %s104
      %p113 = scmp.eq.s32.totalorder %s21, 2
      %p114 = por %p112, %p113
      %p115 = scmp.ne.s32.totalorder %s104, %s105
      %p116 = scmp.eq.s32.totalorder %s21, 0
      %p117 = por %p115, %p116
      %p118 = scmp.ne.s32.totalorder %s104, %s105
      %p119 = scmp.eq.s32.totalorder %s22, 2
      %p120 = por %p118, %p119
      %p122 = scmp.ne.s32.totalorder %s105, %s121
      %p123 = scmp.eq.s32.totalorder %s22, 0
      %p124 = por %p122, %p123
      %s125 = ssub.s32 %s23, %s42
      %s126 = ssub.s32 %s24, %s38
      %s127 = sor.u32 %s125, %s126
      %p128 = scmp.eq.s32.totalorder %s127, 0
      %s130 = sadd.s32 %s129, 1
      %s131 = scalar_select %p128, %s129, %s130
      %p134 = pneg %p128
      %p135 = scmp.eq.s32.totalorder %s16, 2
      %p136 = por %p134, %p135
      %p137 = scmp.ne.s32.totalorder %s129, %s132
      %p138 = scmp.eq.s32.totalorder %s16, 0
      %p139 = por %p137, %p138
      %p140 = scmp.ne.s32.totalorder %s129, %s132
      %p141 = scmp.eq.s32.totalorder %s21, 2
      %p142 = por %p140, %p141
      %p143 = scmp.ne.s32.totalorder %s132, %s133
      %p144 = scmp.eq.s32.totalorder %s21, 0
      %p145 = por %p143, %p144
      %p146 = scmp.ne.s32.totalorder %s132, %s133
      %p147 = scmp.eq.s32.totalorder %s22, 2
      %p148 = por %p146, %p147
      %p150 = scmp.ne.s32.totalorder %s133, %s149
      %p151 = scmp.eq.s32.totalorder %s22, 0
      %p152 = por %p150, %p151
      %p153 = scmp.le.s32.totalorder 1, %s16
      %p154 = scmp.lt.s32.totalorder %s16, 4
      %p155 = pnand %p153, %p154
      %p156 = pneg %p155
      // Predicated region
      $region9: #{tpu_custom_call.1} parent=5 // pred_check
        _
      $region10: #{tpu_custom_call.1} parent=5 // pred_check_branch
        %158 = sbr.rel (%p155) target = $region12
      $region11: #{tpu_custom_call.1} parent=5 // pred_region
        %s159 = ssub.s32 %s16, 1
        // Predicated region
        $region13: #{tpu_custom_call.1} parent=11 // pred_check
          %p160 = pneg %p63
        $region14: #{tpu_custom_call.1} parent=11 // pred_check_branch
          %162 = sbr.rel (%p160) target = $region16
        $region15: #{tpu_custom_call.1} parent=11 // pred_region
          %s163 = smul.u32 32, %s26
          %s164 = smul.u32 2, %s28
          %s166 = ssub.s32 8192, 8192
          %167 = vsyncadd [#allocation4], %s166
          %s168 = smul.addr %s163, 2
          %s169 = sadd.s32 %s164, %s168
          %s170 = smul.addr %s169, 128
          %s171 = scalar_lea.hbm %s0, %s170
          %s172 = sshll.u32 [#allocation3], 4
          %s173 = int_to_ptr.vmem [resolvable:$true] %s172
          %178 = dma.hbm_to_vmem [thread:$0]  %s171, 8192, %s173, [#allocation4], 256, 256, 16
        $region16: #{tpu_custom_call.1} parent=11 // pred_fallthru
          _
      $region12: #{tpu_custom_call.1} parent=5 // pred_fallthru
        _
      %p179 = scmp.lt.s32.totalorder %s16, 3
      // Predicated region
      $region17: #{tpu_custom_call.1} parent=5 // pred_check
        %p180 = pneg %p179
      $region18: #{tpu_custom_call.1} parent=5 // pred_check_branch
        %182 = sbr.rel (%p180) target = $region20
      $region19: #{tpu_custom_call.1} parent=5 // pred_region
        // Predicated region
        $region21: #{tpu_custom_call.1} parent=19 // pred_check
          %p183 = pneg %p85
        $region22: #{tpu_custom_call.1} parent=19 // pred_check_branch
          %185 = sbr.rel (%p183) target = $region24
        $region23: #{tpu_custom_call.1} parent=19 // pred_region
          %s186 = sand.u32 %s75, 1
          %s187 = scalar_lea.sflag [#allocation7], %s186
          %s188 = sand.u32 %s75, 1
          %s189 = smul.addr %s188, 512
          %s190 = scalar_lea.vmem [#allocation6], %s189
          %s191 = smul.u32 32, %s25
          %s192 = smul.u32 2, %s24
          %s194 = ssub.s32 8192, 8192
          %195 = vsyncadd %s187, %s194
          %s196 = smul.addr %s191, 6
          %s197 = sadd.s32 %s192, %s196
          %s198 = smul.addr %s197, 128
          %s199 = scalar_lea.hbm %s1, %s198
          %s200 = sshll.u32 %s190, 4
          %s201 = int_to_ptr.vmem [resolvable:$true] %s200
          %206 = dma.hbm_to_vmem [thread:$0]  %s199, 8192, %s201, %s187, 768, 256, 16
        $region24: #{tpu_custom_call.1} parent=19 // pred_fallthru
          _
        // Predicated region
        $region25: #{tpu_custom_call.1} parent=19 // pred_check
          %p207 = pneg %p111
        $region26: #{tpu_custom_call.1} parent=19 // pred_check_branch
          %209 = sbr.rel (%p207) target = $region28
        $region27: #{tpu_custom_call.1} parent=19 // pred_region
          %s210 = smul.u32 2, %s24
          %p211 = scmp.lt.s32.totalorder %s210, 5
          %s212 = scalar_select %p211, %s210, 5
          %s213 = scalar_lea.vmem %s2, %s212
          %s214 = smul.u32 2, %s24
        $region28: #{tpu_custom_call.1} parent=19 // pred_fallthru
          _
      $region20: #{tpu_custom_call.1} parent=5 // pred_fallthru
        _
      %p215 = scmp.le.s32.totalorder 1, %s16
      %p216 = scmp.lt.s32.totalorder %s16, 4
      %p217 = pnand %p215, %p216
      %p218 = pneg %p217
      // Predicated region
      $region29: #{tpu_custom_call.1} parent=5 // pred_check
        _
      $region30: #{tpu_custom_call.1} parent=5 // pred_check_branch
        %220 = sbr.rel (%p217) target = $region32
      $region31: #{tpu_custom_call.1} parent=5 // pred_region
        %s221 = ssub.s32 %s16, 1
        // Predicated region
        $region33: #{tpu_custom_call.1} parent=31 // pred_check
          %p222 = pneg %p63
        $region34: #{tpu_custom_call.1} parent=31 // pred_check_branch
          %224 = sbr.rel (%p222) target = $region36
        $region35: #{tpu_custom_call.1} parent=31 // pred_region
          %225 = dma.done [#allocation4], 8192
        $region36: #{tpu_custom_call.1} parent=31 // pred_fallthru
          _
        %s226 = sand.u32 %s78, 1
        %s227 = scalar_lea.sflag [#allocation7], %s226
        %s228 = sand.u32 %s78, 1
        %s229 = smul.addr %s228, 512
        %s230 = scalar_lea.vmem [#allocation6], %s229
        // Predicated region
        $region37: #{tpu_custom_call.1} parent=31 // pred_check
          %p231 = pneg %p91
        $region38: #{tpu_custom_call.1} parent=31 // pred_check_branch
          %233 = sbr.rel (%p231) target = $region40
        $region39: #{tpu_custom_call.1} parent=31 // pred_region
          %234 = dma.done %s227, 8192
        $region40: #{tpu_custom_call.1} parent=31 // pred_fallthru
          _
        %p235 = pneg %p63
        %p236 = pneg %p60
        %s237 = sand.u32 %s78, 1
        %s238 = scalar_lea.sflag [#allocation7], %s237
        %s239 = sand.u32 %s78, 1
        %s240 = smul.addr %s239, 512
        %s241 = scalar_lea.vmem [#allocation6], %s240
        %p242 = pneg %p91
        %p243 = pneg %p88
        %s244 = smul.u32 2, %s27
        %p245 = scmp.lt.s32.totalorder %s244, 5
        %s246 = scalar_select %p245, %s244, 5
        %s247 = scalar_lea.vmem %s2, %s246
        %p248 = pneg %p117
        %p249 = pneg %p114
        %p250 = pneg %p145
        %p251 = pneg %p142
        %s252 = sand.u32 %s132, 1
        %s253 = scalar_lea.sflag [#allocation5], %s252
        %s254 = sand.u32 %s132, 1
        %s255 = smul.addr %s254, 512
        %s256 = scalar_lea.vmem [#allocation8], %s255
        %s257 = smul.u32 32, %s26
        %s258 = smul.u32 2, %s28
        %s259 = smul.u32 32, %s28
        %s260 = smul.u32 2, %s27
        %s261 = smul.u32 2, %s27
        %p262 = scmp.lt.s32.totalorder %s261, 5
        %s263 = scalar_select %p262, %s261, 5
        %s264 = scalar_lea.vmem %s2, %s263
        %s265 = smul.u32 2, %s27
        %s266 = smul.u32 32, %s26
        %s267 = smul.u32 2, %s27
        %p268 = scmp.eq.s32.totalorder %s28, 0
        // Predicated region
        $region41: #{tpu_custom_call.1} parent=31 // pred_check
          %p269 = pneg %p268
        $region42: #{tpu_custom_call.1} parent=31 // pred_check_branch
          %271 = sbr.rel (%p269) target = $region44
        $region43: #{tpu_custom_call.1} parent=31 // pred_region
          %272 = vst [vmem:[#allocation2] sm:$0xff] 0.0
          %273 = vst [vmem:[#allocation2 + $0x8] sm:$0xff] 0.0
          %274 = vst [vmem:[#allocation2 + $0x10] sm:$0xff] 0.0
          %275 = vst [vmem:[#allocation2 + $0x18] sm:$0xff] 0.0
          %276 = vst [vmem:[#allocation2 + $0x20] sm:$0xff] 0.0
          %277 = vst [vmem:[#allocation2 + $0x28] sm:$0xff] 0.0
          %278 = vst [vmem:[#allocation2 + $0x30] sm:$0xff] 0.0
          %279 = vst [vmem:[#allocation2 + $0x38] sm:$0xff] 0.0
          %280 = vst [vmem:[#allocation2 + $0x40] sm:$0xff] 0.0
          %281 = vst [vmem:[#allocation2 + $0x48] sm:$0xff] 0.0
          %282 = vst [vmem:[#allocation2 + $0x50] sm:$0xff] 0.0
          %283 = vst [vmem:[#allocation2 + $0x58] sm:$0xff] 0.0
          %284 = vst [vmem:[#allocation2 + $0x60] sm:$0xff] 0.0
          %285 = vst [vmem:[#allocation2 + $0x68] sm:$0xff] 0.0
          %286 = vst [vmem:[#allocation2 + $0x70] sm:$0xff] 0.0
          %287 = vst [vmem:[#allocation2 + $0x78] sm:$0xff] 0.0
          %288 = vst [vmem:[#allocation2 + $0x80] sm:$0xff] 0.0
          %289 = vst [vmem:[#allocation2 + $0x88] sm:$0xff] 0.0
          %290 = vst [vmem:[#allocation2 + $0x90] sm:$0xff] 0.0
          %291 = vst [vmem:[#allocation2 + $0x98] sm:$0xff] 0.0
          %292 = vst [vmem:[#allocation2 + $0xa0] sm:$0xff] 0.0
          %293 = vst [vmem:[#allocation2 + $0xa8] sm:$0xff] 0.0
          %294 = vst [vmem:[#allocation2 + $0xb0] sm:$0xff] 0.0
          %295 = vst [vmem:[#allocation2 + $0xb8] sm:$0xff] 0.0
          %296 = vst [vmem:[#allocation2 + $0xc0] sm:$0xff] 0.0
          %297 = vst [vmem:[#allocation2 + $0xc8] sm:$0xff] 0.0
          %298 = vst [vmem:[#allocation2 + $0xd0] sm:$0xff] 0.0
          %299 = vst [vmem:[#allocation2 + $0xd8] sm:$0xff] 0.0
          %300 = vst [vmem:[#allocation2 + $0xe0] sm:$0xff] 0.0
          %301 = vst [vmem:[#allocation2 + $0xe8] sm:$0xff] 0.0
          %302 = vst [vmem:[#allocation2 + $0xf0] sm:$0xff] 0.0
          %303 = vst [vmem:[#allocation2 + $0xf8] sm:$0xff] 0.0
          %304 = vst [vmem:[#allocation2 + $0x100] sm:$0xff] 0.0
          %305 = vst [vmem:[#allocation2 + $0x108] sm:$0xff] 0.0
          %306 = vst [vmem:[#allocation2 + $0x110] sm:$0xff] 0.0
          %307 = vst [vmem:[#allocation2 + $0x118] sm:$0xff] 0.0
          %308 = vst [vmem:[#allocation2 + $0x120] sm:$0xff] 0.0
          %309 = vst [vmem:[#allocation2 + $0x128] sm:$0xff] 0.0
          %310 = vst [vmem:[#allocation2 + $0x130] sm:$0xff] 0.0
          %311 = vst [vmem:[#allocation2 + $0x138] sm:$0xff] 0.0
          %312 = vst [vmem:[#allocation2 + $0x140] sm:$0xff] 0.0
          %313 = vst [vmem:[#allocation2 + $0x148] sm:$0xff] 0.0
          %314 = vst [vmem:[#allocation2 + $0x150] sm:$0xff] 0.0
          %315 = vst [vmem:[#allocation2 + $0x158] sm:$0xff] 0.0
          %316 = vst [vmem:[#allocation2 + $0x160] sm:$0xff] 0.0
          %317 = vst [vmem:[#allocation2 + $0x168] sm:$0xff] 0.0
          %318 = vst [vmem:[#allocation2 + $0x170] sm:$0xff] 0.0
          %319 = vst [vmem:[#allocation2 + $0x178] sm:$0xff] 0.0
          %320 = vst [vmem:[#allocation2 + $0x180] sm:$0xff] 0.0
          %321 = vst [vmem:[#allocation2 + $0x188] sm:$0xff] 0.0
          %322 = vst [vmem:[#allocation2 + $0x190] sm:$0xff] 0.0
          %323 = vst [vmem:[#allocation2 + $0x198] sm:$0xff] 0.0
          %324 = vst [vmem:[#allocation2 + $0x1a0] sm:$0xff] 0.0
          %325 = vst [vmem:[#allocation2 + $0x1a8] sm:$0xff] 0.0
          %326 = vst [vmem:[#allocation2 + $0x1b0] sm:$0xff] 0.0
          %327 = vst [vmem:[#allocation2 + $0x1b8] sm:$0xff] 0.0
          %328 = vst [vmem:[#allocation2 + $0x1c0] sm:$0xff] 0.0
          %329 = vst [vmem:[#allocation2 + $0x1c8] sm:$0xff] 0.0
          %330 = vst [vmem:[#allocation2 + $0x1d0] sm:$0xff] 0.0
          %331 = vst [vmem:[#allocation2 + $0x1d8] sm:$0xff] 0.0
          %332 = vst [vmem:[#allocation2 + $0x1e0] sm:$0xff] 0.0
          %333 = vst [vmem:[#allocation2 + $0x1e8] sm:$0xff] 0.0
          %334 = vst [vmem:[#allocation2 + $0x1f0] sm:$0xff] 0.0
          %335 = vst [vmem:[#allocation2 + $0x1f8] sm:$0xff] 0.0
        $region44: #{tpu_custom_call.1} parent=31 // pred_fallthru
          _
        %v336 = vld [vmem:[#allocation2] sm:$0xff]
        %v337 = vld [vmem:[#allocation2 + $0x8] sm:$0xff]
        %v338 = vld [vmem:[#allocation2 + $0x10] sm:$0xff]
        %v339 = vld [vmem:[#allocation2 + $0x18] sm:$0xff]
        %v340 = vld [vmem:[#allocation2 + $0x20] sm:$0xff]
        %v341 = vld [vmem:[#allocation2 + $0x28] sm:$0xff]
        %v342 = vld [vmem:[#allocation2 + $0x30] sm:$0xff]
        %v343 = vld [vmem:[#allocation2 + $0x38] sm:$0xff]
        %v344 = vld [vmem:[#allocation2 + $0x40] sm:$0xff]
        %v345 = vld [vmem:[#allocation2 + $0x48] sm:$0xff]
        %v346 = vld [vmem:[#allocation2 + $0x50] sm:$0xff]
        %v347 = vld [vmem:[#allocation2 + $0x58] sm:$0xff]
        %v348 = vld [vmem:[#allocation2 + $0x60] sm:$0xff]
        %v349 = vld [vmem:[#allocation2 + $0x68] sm:$0xff]
        %v350 = vld [vmem:[#allocation2 + $0x70] sm:$0xff]
        %v351 = vld [vmem:[#allocation2 + $0x78] sm:$0xff]
        %v352 = vld [vmem:[#allocation2 + $0x80] sm:$0xff]
        %v353 = vld [vmem:[#allocation2 + $0x88] sm:$0xff]
        %v354 = vld [vmem:[#allocation2 + $0x90] sm:$0xff]
        %v355 = vld [vmem:[#allocation2 + $0x98] sm:$0xff]
        %v356 = vld [vmem:[#allocation2 + $0xa0] sm:$0xff]
        %v357 = vld [vmem:[#allocation2 + $0xa8] sm:$0xff]
        %v358 = vld [vmem:[#allocation2 + $0xb0] sm:$0xff]
        %v359 = vld [vmem:[#allocation2 + $0xb8] sm:$0xff]
        %v360 = vld [vmem:[#allocation2 + $0xc0] sm:$0xff]
        %v361 = vld [vmem:[#allocation2 + $0xc8] sm:$0xff]
        %v362 = vld [vmem:[#allocation2 + $0xd0] sm:$0xff]
        %v363 = vld [vmem:[#allocation2 + $0xd8] sm:$0xff]
        %v364 = vld [vmem:[#allocation2 + $0xe0] sm:$0xff]
        %v365 = vld [vmem:[#allocation2 + $0xe8] sm:$0xff]
        %v366 = vld [vmem:[#allocation2 + $0xf0] sm:$0xff]
        %v367 = vld [vmem:[#allocation2 + $0xf8] sm:$0xff]
        %v368 = vld [vmem:[#allocation2 + $0x100] sm:$0xff]
        %v369 = vld [vmem:[#allocation2 + $0x108] sm:$0xff]
        %v370 = vld [vmem:[#allocation2 + $0x110] sm:$0xff]
        %v371 = vld [vmem:[#allocation2 + $0x118] sm:$0xff]
        %v372 = vld [vmem:[#allocation2 + $0x120] sm:$0xff]
        %v373 = vld [vmem:[#allocation2 + $0x128] sm:$0xff]
        %v374 = vld [vmem:[#allocation2 + $0x130] sm:$0xff]
        %v375 = vld [vmem:[#allocation2 + $0x138] sm:$0xff]
        %v376 = vld [vmem:[#allocation2 + $0x140] sm:$0xff]
        %v377 = vld [vmem:[#allocation2 + $0x148] sm:$0xff]
        %v378 = vld [vmem:[#allocation2 + $0x150] sm:$0xff]
        %v379 = vld [vmem:[#allocation2 + $0x158] sm:$0xff]
        %v380 = vld [vmem:[#allocation2 + $0x160] sm:$0xff]
        %v381 = vld [vmem:[#allocation2 + $0x168] sm:$0xff]
        %v382 = vld [vmem:[#allocation2 + $0x170] sm:$0xff]
        %v383 = vld [vmem:[#allocation2 + $0x178] sm:$0xff]
        %v384 = vld [vmem:[#allocation2 + $0x180] sm:$0xff]
        %v385 = vld [vmem:[#allocation2 + $0x188] sm:$0xff]
        %v386 = vld [vmem:[#allocation2 + $0x190] sm:$0xff]
        %v387 = vld [vmem:[#allocation2 + $0x198] sm:$0xff]
        %v388 = vld [vmem:[#allocation2 + $0x1a0] sm:$0xff]
        %v389 = vld [vmem:[#allocation2 + $0x1a8] sm:$0xff]
        %v390 = vld [vmem:[#allocation2 + $0x1b0] sm:$0xff]
        %v391 = vld [vmem:[#allocation2 + $0x1b8] sm:$0xff]
        %v392 = vld [vmem:[#allocation2 + $0x1c0] sm:$0xff]
        %v393 = vld [vmem:[#allocation2 + $0x1c8] sm:$0xff]
        %v394 = vld [vmem:[#allocation2 + $0x1d0] sm:$0xff]
        %v395 = vld [vmem:[#allocation2 + $0x1d8] sm:$0xff]
        %v396 = vld [vmem:[#allocation2 + $0x1e0] sm:$0xff]
        %v397 = vld [vmem:[#allocation2 + $0x1e8] sm:$0xff]
        %v398 = vld [vmem:[#allocation2 + $0x1f0] sm:$0xff]
        %v399 = vld [vmem:[#allocation2 + $0x1f8] sm:$0xff]
        %v400 = vld [vmem:[#allocation3] sm:$0xff]
        %v401 = vld [vmem:[#allocation3 + $0x8] sm:$0xff]
        %v402 = vld [vmem:[#allocation3 + $0x10] sm:$0xff]
        %v403 = vld [vmem:[#allocation3 + $0x18] sm:$0xff]
        %v404 = vld [vmem:[#allocation3 + $0x20] sm:$0xff]
        %v405 = vld [vmem:[#allocation3 + $0x28] sm:$0xff]
        %v406 = vld [vmem:[#allocation3 + $0x30] sm:$0xff]
        %v407 = vld [vmem:[#allocation3 + $0x38] sm:$0xff]
        %v408 = vld [vmem:[#allocation3 + $0x40] sm:$0xff]
        %v409 = vld [vmem:[#allocation3 + $0x48] sm:$0xff]
        %v410 = vld [vmem:[#allocation3 + $0x50] sm:$0xff]
        %v411 = vld [vmem:[#allocation3 + $0x58] sm:$0xff]
        %v412 = vld [vmem:[#allocation3 + $0x60] sm:$0xff]
        %v413 = vld [vmem:[#allocation3 + $0x68] sm:$0xff]
        %v414 = vld [vmem:[#allocation3 + $0x70] sm:$0xff]
        %v415 = vld [vmem:[#allocation3 + $0x78] sm:$0xff]
        %v416 = vld [vmem:[#allocation3 + $0x80] sm:$0xff]
        %v417 = vld [vmem:[#allocation3 + $0x88] sm:$0xff]
        %v418 = vld [vmem:[#allocation3 + $0x90] sm:$0xff]
        %v419 = vld [vmem:[#allocation3 + $0x98] sm:$0xff]
        %v420 = vld [vmem:[#allocation3 + $0xa0] sm:$0xff]
        %v421 = vld [vmem:[#allocation3 + $0xa8] sm:$0xff]
        %v422 = vld [vmem:[#allocation3 + $0xb0] sm:$0xff]
        %v423 = vld [vmem:[#allocation3 + $0xb8] sm:$0xff]
        %v424 = vld [vmem:[#allocation3 + $0xc0] sm:$0xff]
        %v425 = vld [vmem:[#allocation3 + $0xc8] sm:$0xff]
        %v426 = vld [vmem:[#allocation3 + $0xd0] sm:$0xff]
        %v427 = vld [vmem:[#allocation3 + $0xd8] sm:$0xff]
        %v428 = vld [vmem:[#allocation3 + $0xe0] sm:$0xff]
        %v429 = vld [vmem:[#allocation3 + $0xe8] sm:$0xff]
        %v430 = vld [vmem:[#allocation3 + $0xf0] sm:$0xff]
        %v431 = vld [vmem:[#allocation3 + $0xf8] sm:$0xff]
        %v432 = vld [vmem:[#allocation3 + $0x100] sm:$0xff]
        %v433 = vld [vmem:[#allocation3 + $0x108] sm:$0xff]
        %v434 = vld [vmem:[#allocation3 + $0x110] sm:$0xff]
        %v435 = vld [vmem:[#allocation3 + $0x118] sm:$0xff]
        %v436 = vld [vmem:[#allocation3 + $0x120] sm:$0xff]
        %v437 = vld [vmem:[#allocation3 + $0x128] sm:$0xff]
        %v438 = vld [vmem:[#allocation3 + $0x130] sm:$0xff]
        %v439 = vld [vmem:[#allocation3 + $0x138] sm:$0xff]
        %v440 = vld [vmem:[#allocation3 + $0x140] sm:$0xff]
        %v441 = vld [vmem:[#allocation3 + $0x148] sm:$0xff]
        %v442 = vld [vmem:[#allocation3 + $0x150] sm:$0xff]
        %v443 = vld [vmem:[#allocation3 + $0x158] sm:$0xff]
        %v444 = vld [vmem:[#allocation3 + $0x160] sm:$0xff]
        %v445 = vld [vmem:[#allocation3 + $0x168] sm:$0xff]
        %v446 = vld [vmem:[#allocation3 + $0x170] sm:$0xff]
        %v447 = vld [vmem:[#allocation3 + $0x178] sm:$0xff]
        %v448 = vld [vmem:[#allocation3 + $0x180] sm:$0xff]
        %v449 = vld [vmem:[#allocation3 + $0x188] sm:$0xff]
        %v450 = vld [vmem:[#allocation3 + $0x190] sm:$0xff]
        %v451 = vld [vmem:[#allocation3 + $0x198] sm:$0xff]
        %v452 = vld [vmem:[#allocation3 + $0x1a0] sm:$0xff]
        %v453 = vld [vmem:[#allocation3 + $0x1a8] sm:$0xff]
        %v454 = vld [vmem:[#allocation3 + $0x1b0] sm:$0xff]
        %v455 = vld [vmem:[#allocation3 + $0x1b8] sm:$0xff]
        %v456 = vld [vmem:[#allocation3 + $0x1c0] sm:$0xff]
        %v457 = vld [vmem:[#allocation3 + $0x1c8] sm:$0xff]
        %v458 = vld [vmem:[#allocation3 + $0x1d0] sm:$0xff]
        %v459 = vld [vmem:[#allocation3 + $0x1d8] sm:$0xff]
        %v460 = vld [vmem:[#allocation3 + $0x1e0] sm:$0xff]
        %v461 = vld [vmem:[#allocation3 + $0x1e8] sm:$0xff]
        %v462 = vld [vmem:[#allocation3 + $0x1f0] sm:$0xff]
        %v463 = vld [vmem:[#allocation3 + $0x1f8] sm:$0xff]
        %v464 = vld [vmem:[%s230] sm:$0xff]
        %v465 = vld [vmem:[%s230 + $0x8] sm:$0xff]
        %v466 = vld [vmem:[%s230 + $0x10] sm:$0xff]
        %v467 = vld [vmem:[%s230 + $0x18] sm:$0xff]
        %v468 = vld [vmem:[%s230 + $0x20] sm:$0xff]
        %v469 = vld [vmem:[%s230 + $0x28] sm:$0xff]
        %v470 = vld [vmem:[%s230 + $0x30] sm:$0xff]
        %v471 = vld [vmem:[%s230 + $0x38] sm:$0xff]
        %v472 = vld [vmem:[%s230 + $0x40] sm:$0xff]
        %v473 = vld [vmem:[%s230 + $0x48] sm:$0xff]
        %v474 = vld [vmem:[%s230 + $0x50] sm:$0xff]
        %v475 = vld [vmem:[%s230 + $0x58] sm:$0xff]
        %v476 = vld [vmem:[%s230 + $0x60] sm:$0xff]
        %v477 = vld [vmem:[%s230 + $0x68] sm:$0xff]
        %v478 = vld [vmem:[%s230 + $0x70] sm:$0xff]
        %v479 = vld [vmem:[%s230 + $0x78] sm:$0xff]
        %v480 = vld [vmem:[%s230 + $0x80] sm:$0xff]
        %v481 = vld [vmem:[%s230 + $0x88] sm:$0xff]
        %v482 = vld [vmem:[%s230 + $0x90] sm:$0xff]
        %v483 = vld [vmem:[%s230 + $0x98] sm:$0xff]
        %v484 = vld [vmem:[%s230 + $0xa0] sm:$0xff]
        %v485 = vld [vmem:[%s230 + $0xa8] sm:$0xff]
        %v486 = vld [vmem:[%s230 + $0xb0] sm:$0xff]
        %v487 = vld [vmem:[%s230 + $0xb8] sm:$0xff]
        %v488 = vld [vmem:[%s230 + $0xc0] sm:$0xff]
        %v489 = vld [vmem:[%s230 + $0xc8] sm:$0xff]
        %v490 = vld [vmem:[%s230 + $0xd0] sm:$0xff]
        %v491 = vld [vmem:[%s230 + $0xd8] sm:$0xff]
        %v492 = vld [vmem:[%s230 + $0xe0] sm:$0xff]
        %v493 = vld [vmem:[%s230 + $0xe8] sm:$0xff]
        %v494 = vld [vmem:[%s230 + $0xf0] sm:$0xff]
        %v495 = vld [vmem:[%s230 + $0xf8] sm:$0xff]
        %v496 = vld [vmem:[%s230 + $0x100] sm:$0xff]
        %v497 = vld [vmem:[%s230 + $0x108] sm:$0xff]
        %v498 = vld [vmem:[%s230 + $0x110] sm:$0xff]
        %v499 = vld [vmem:[%s230 + $0x118] sm:$0xff]
        %v500 = vld [vmem:[%s230 + $0x120] sm:$0xff]
        %v501 = vld [vmem:[%s230 + $0x128] sm:$0xff]
        %v502 = vld [vmem:[%s230 + $0x130] sm:$0xff]
        %v503 = vld [vmem:[%s230 + $0x138] sm:$0xff]
        %v504 = vld [vmem:[%s230 + $0x140] sm:$0xff]
        %v505 = vld [vmem:[%s230 + $0x148] sm:$0xff]
        %v506 = vld [vmem:[%s230 + $0x150] sm:$0xff]
        %v507 = vld [vmem:[%s230 + $0x158] sm:$0xff]
        %v508 = vld [vmem:[%s230 + $0x160] sm:$0xff]
        %v509 = vld [vmem:[%s230 + $0x168] sm:$0xff]
        %v510 = vld [vmem:[%s230 + $0x170] sm:$0xff]
        %v511 = vld [vmem:[%s230 + $0x178] sm:$0xff]
        %v512 = vld [vmem:[%s230 + $0x180] sm:$0xff]
        %v513 = vld [vmem:[%s230 + $0x188] sm:$0xff]
        %v514 = vld [vmem:[%s230 + $0x190] sm:$0xff]
        %v515 = vld [vmem:[%s230 + $0x198] sm:$0xff]
        %v516 = vld [vmem:[%s230 + $0x1a0] sm:$0xff]
        %v517 = vld [vmem:[%s230 + $0x1a8] sm:$0xff]
        %v518 = vld [vmem:[%s230 + $0x1b0] sm:$0xff]
        %v519 = vld [vmem:[%s230 + $0x1b8] sm:$0xff]
        %v520 = vld [vmem:[%s230 + $0x1c0] sm:$0xff]
        %v521 = vld [vmem:[%s230 + $0x1c8] sm:$0xff]
        %v522 = vld [vmem:[%s230 + $0x1d0] sm:$0xff]
        %v523 = vld [vmem:[%s230 + $0x1d8] sm:$0xff]
        %v524 = vld [vmem:[%s230 + $0x1e0] sm:$0xff]
        %v525 = vld [vmem:[%s230 + $0x1e8] sm:$0xff]
        %v526 = vld [vmem:[%s230 + $0x1f0] sm:$0xff]
        %v527 = vld [vmem:[%s230 + $0x1f8] sm:$0xff]
        %528 = vmatprep.subr.mxu0 %v465
        %529 = vmatpush1.msra.mxu0 %v464
        %530 = vmatprep.subr.mxu0 %v467
        %531 = vmatpush1.msra.mxu0 %v466
        %532 = vmatprep.subr.mxu0 %v469
        %533 = vmatpush1.msra.mxu0 %v468
        %534 = vmatprep.subr.mxu0 %v471
        %535 = vmatpush1.msra.mxu0 %v470
        %536 = vmatprep.subr.mxu0 %v473
        %537 = vmatpush1.msra.mxu0 %v472
        %538 = vmatprep.subr.mxu0 %v475
        %539 = vmatpush1.msra.mxu0 %v474
        %540 = vmatprep.subr.mxu0 %v477
        %541 = vmatpush1.msra.mxu0 %v476
        %542 = vmatprep.subr.mxu0 %v479
        %543 = vmatpush1.msra.mxu0 %v478
        %544 = vmatprep.subr.mxu0 %v481
        %545 = vmatpush1.msra.mxu0 %v480
        %546 = vmatprep.subr.mxu0 %v483
        %547 = vmatpush1.msra.mxu0 %v482
        %548 = vmatprep.subr.mxu0 %v485
        %549 = vmatpush1.msra.mxu0 %v484
        %550 = vmatprep.subr.mxu0 %v487
        %551 = vmatpush1.msra.mxu0 %v486
        %552 = vmatprep.subr.mxu0 %v489
        %553 = vmatpush1.msra.mxu0 %v488
        %554 = vmatprep.subr.mxu0 %v491
        %555 = vmatpush1.msra.mxu0 %v490
        %556 = vmatprep.subr.mxu0 %v493
        %557 = vmatpush1.msra.mxu0 %v492
        %558 = vmatprep.subr.mxu0 %v495
        %559 = vmatpush1.msra.mxu0 %v494
        %560 = vmatprep.subr.mxu0 %v497
        %561 = vmatpush1.msra.mxu0 %v496
        %562 = vmatprep.subr.mxu0 %v499
        %563 = vmatpush1.msra.mxu0 %v498
        %564 = vmatprep.subr.mxu0 %v501
        %565 = vmatpush1.msra.mxu0 %v500
        %566 = vmatprep.subr.mxu0 %v503
        %567 = vmatpush1.msra.mxu0 %v502
        %568 = vmatprep.subr.mxu0 %v505
        %569 = vmatpush1.msra.mxu0 %v504
        %570 = vmatprep.subr.mxu0 %v507
        %571 = vmatpush1.msra.mxu0 %v506
        %572 = vmatprep.subr.mxu0 %v509
        %573 = vmatpush1.msra.mxu0 %v508
        %574 = vmatprep.subr.mxu0 %v511
        %575 = vmatpush1.msra.mxu0 %v510
        %576 = vmatprep.subr.mxu0 %v513
        %577 = vmatpush1.msra.mxu0 %v512
        %578 = vmatprep.subr.mxu0 %v515
        %579 = vmatpush1.msra.mxu0 %v514
        %580 = vmatprep.subr.mxu0 %v517
        %581 = vmatpush1.msra.mxu0 %v516
        %582 = vmatprep.subr.mxu0 %v519
        %583 = vmatpush1.msra.mxu0 %v518
        %584 = vmatprep.subr.mxu0 %v521
        %585 = vmatpush1.msra.mxu0 %v520
        %586 = vmatprep.subr.mxu0 %v523
        %587 = vmatpush1.msra.mxu0 %v522
        %588 = vmatprep.subr.mxu0 %v525
        %589 = vmatpush1.msra.mxu0 %v524
        %590 = vmatprep.subr.mxu0 %v527
        %591 = vmatpush1.msra.mxu0 %v526
        %592 = vmatprep.mubr.f32.mxu0 %v401
        %593 = vmatmul.mubr.f32.gmra.mrb[0].mxu0 %v400
        %v594 = vpop.f32.mrb[0].mxu0
        %v595 = vadd.f32 0.0, %v594
        %v596 = vpop.f32.mrb[0].mxu0
        %v597 = vadd.f32 0.0, %v596
        %598 = vmatprep.mubr.f32.mxu0 %v403
        %599 = vmatmul.mubr.f32.gmra.mrb[0].mxu0 %v402
        %v600 = vpop.f32.mrb[0].mxu0
        %v601 = vadd.f32 0.0, %v600
        %v602 = vpop.f32.mrb[0].mxu0
        %v603 = vadd.f32 0.0, %v602
        %604 = vmatprep.mubr.f32.mxu0 %v405
        %605 = vmatmul.mubr.f32.gmra.mrb[0].mxu0 %v404
        %v606 = vpop.f32.mrb[0].mxu0
        %v607 = vadd.f32 0.0, %v606
        %v608 = vpop.f32.mrb[0].mxu0
        %v609 = vadd.f32 0.0, %v608
        %610 = vmatprep.mubr.f32.mxu0 %v407
        %611 = vmatmul.mubr.f32.gmra.mrb[0].mxu0 %v406
        %v612 = vpop.f32.mrb[0].mxu0
        %v613 = vadd.f32 0.0, %v612
        %v614 = vpop.f32.mrb[0].mxu0
        %v615 = vadd.f32 0.0, %v614
        %616 = vmatprep.mubr.f32.mxu0 %v409
        %617 = vmatmul.mubr.f32.gmra.mrb[0].mxu0 %v408
        %v618 = vpop.f32.mrb[0].mxu0
        %v619 = vadd.f32 0.0, %v618
        %v620 = vpop.f32.mrb[0].mxu0
        %v621 = vadd.f32 0.0, %v620
        %622 = vmatprep.mubr.f32.mxu0 %v411
        %623 = vmatmul.mubr.f32.gmra.mrb[0].mxu0 %v410
        %v624 = vpop.f32.mrb[0].mxu0
        %v625 = vadd.f32 0.0, %v624
        %v626 = vpop.f32.mrb[0].mxu0
        %v627 = vadd.f32 0.0, %v626
        %628 = vmatprep.mubr.f32.mxu0 %v413
        %629 = vmatmul.mubr.f32.gmra.mrb[0].mxu0 %v412
        %v630 = vpop.f32.mrb[0].mxu0
        %v631 = vadd.f32 0.0, %v630
        %v632 = vpop.f32.mrb[0].mxu0
        %v633 = vadd.f32 0.0, %v632
        %634 = vmatprep.mubr.f32.mxu0 %v415
        %635 = vmatmul.mubr.f32.gmra.mrb[0].mxu0 %v414
        %v636 = vpop.f32.mrb[0].mxu0
        %v637 = vadd.f32 0.0, %v636
        %v638 = vpop.f32.mrb[0].mxu0
        %v639 = vadd.f32 0.0, %v638
        %640 = vmatprep.mubr.f32.mxu0 %v417
        %641 = vmatmul.mubr.f32.gmra.mrb[0].mxu0 %v416
        %v642 = vpop.f32.mrb[0].mxu0
        %v643 = vadd.f32 0.0, %v642
        %v644 = vpop.f32.mrb[0].mxu0
        %v645 = vadd.f32 0.0, %v644
        %646 = vmatprep.mubr.f32.mxu0 %v419
        %647 = vmatmul.mubr.f32.gmra.mrb[0].mxu0 %v418
        %v648 = vpop.f32.mrb[0].mxu0
        %v649 = vadd.f32 0.0, %v648
        %v650 = vpop.f32.mrb[0].mxu0
        %v651 = vadd.f32 0.0, %v650
        %652 = vmatprep.mubr.f32.mxu0 %v421
        %653 = vmatmul.mubr.f32.gmra.mrb[0].mxu0 %v420
        %v654 = vpop.f32.mrb[0].mxu0
        %v655 = vadd.f32 0.0, %v654
        %v656 = vpop.f32.mrb[0].mxu0
        %v657 = vadd.f32 0.0, %v656
        %658 = vmatprep.mubr.f32.mxu0 %v423
        %659 = vmatmul.mubr.f32.gmra.mrb[0].mxu0 %v422
        %v660 = vpop.f32.mrb[0].mxu0
        %v661 = vadd.f32 0.0, %v660
        %v662 = vpop.f32.mrb[0].mxu0
        %v663 = vadd.f32 0.0, %v662
        %664 = vmatprep.mubr.f32.mxu0 %v425
        %665 = vmatmul.mubr.f32.gmra.mrb[0].mxu0 %v424
        %v666 = vpop.f32.mrb[0].mxu0
        %v667 = vadd.f32 0.0, %v666
        %v668 = vpop.f32.mrb[0].mxu0
        %v669 = vadd.f32 0.0, %v668
        %670 = vmatprep.mubr.f32.mxu0 %v427
        %671 = vmatmul.mubr.f32.gmra.mrb[0].mxu0 %v426
        %v672 = vpop.f32.mrb[0].mxu0
        %v673 = vadd.f32 0.0, %v672
        %v674 = vpop.f32.mrb[0].mxu0
        %v675 = vadd.f32 0.0, %v674
        %676 = vmatprep.mubr.f32.mxu0 %v429
        %677 = vmatmul.mubr.f32.gmra.mrb[0].mxu0 %v428
        %v678 = vpop.f32.mrb[0].mxu0
        %v679 = vadd.f32 0.0, %v678
        %v680 = vpop.f32.mrb[0].mxu0
        %v681 = vadd.f32 0.0, %v680
        %682 = vmatprep.mubr.f32.mxu0 %v431
        %683 = vmatmul.mubr.f32.gmra.mrb[0].mxu0 %v430
        %v684 = vpop.f32.mrb[0].mxu0
        %v685 = vadd.f32 0.0, %v684
        %v686 = vpop.f32.mrb[0].mxu0
        %v687 = vadd.f32 0.0, %v686
        %688 = vmatprep.mubr.f32.mxu0 %v433
        %689 = vmatmul.mubr.f32.gmra.mrb[0].mxu0 %v432
        %v690 = vpop.f32.mrb[0].mxu0
        %v691 = vadd.f32 0.0, %v690
        %v692 = vpop.f32.mrb[0].mxu0
        %v693 = vadd.f32 0.0, %v692
        %694 = vmatprep.mubr.f32.mxu0 %v435
        %695 = vmatmul.mubr.f32.gmra.mrb[0].mxu0 %v434
        %v696 = vpop.f32.mrb[0].mxu0
        %v697 = vadd.f32 0.0, %v696
        %v698 = vpop.f32.mrb[0].mxu0
        %v699 = vadd.f32 0.0, %v698
        %700 = vmatprep.mubr.f32.mxu0 %v437
        %701 = vmatmul.mubr.f32.gmra.mrb[0].mxu0 %v436
        %v702 = vpop.f32.mrb[0].mxu0
        %v703 = vadd.f32 0.0, %v702
        %v704 = vpop.f32.mrb[0].mxu0
        %v705 = vadd.f32 0.0, %v704
        %706 = vmatprep.mubr.f32.mxu0 %v439
        %707 = vmatmul.mubr.f32.gmra.mrb[0].mxu0 %v438
        %v708 = vpop.f32.mrb[0].mxu0
        %v709 = vadd.f32 0.0, %v708
        %v710 = vpop.f32.mrb[0].mxu0
        %v711 = vadd.f32 0.0, %v710
        %712 = vmatprep.mubr.f32.mxu0 %v441
        %713 = vmatmul.mubr.f32.gmra.mrb[0].mxu0 %v440
        %v714 = vpop.f32.mrb[0].mxu0
        %v715 = vadd.f32 0.0, %v714
        %v716 = vpop.f32.mrb[0].mxu0
        %v717 = vadd.f32 0.0, %v716
        %718 = vmatprep.mubr.f32.mxu0 %v443
        %719 = vmatmul.mubr.f32.gmra.mrb[0].mxu0 %v442
        %v720 = vpop.f32.mrb[0].mxu0
        %v721 = vadd.f32 0.0, %v720
        %v722 = vpop.f32.mrb[0].mxu0
        %v723 = vadd.f32 0.0, %v722
        %724 = vmatprep.mubr.f32.mxu0 %v445
        %725 = vmatmul.mubr.f32.gmra.mrb[0].mxu0 %v444
        %v726 = vpop.f32.mrb[0].mxu0
        %v727 = vadd.f32 0.0, %v726
        %v728 = vpop.f32.mrb[0].mxu0
        %v729 = vadd.f32 0.0, %v728
        %730 = vmatprep.mubr.f32.mxu0 %v447
        %731 = vmatmul.mubr.f32.gmra.mrb[0].mxu0 %v446
        %v732 = vpop.f32.mrb[0].mxu0
        %v733 = vadd.f32 0.0, %v732
        %v734 = vpop.f32.mrb[0].mxu0
        %v735 = vadd.f32 0.0, %v734
        %736 = vmatprep.mubr.f32.mxu0 %v449
        %737 = vmatmul.mubr.f32.gmra.mrb[0].mxu0 %v448
        %v738 = vpop.f32.mrb[0].mxu0
        %v739 = vadd.f32 0.0, %v738
        %v740 = vpop.f32.mrb[0].mxu0
        %v741 = vadd.f32 0.0, %v740
        %742 = vmatprep.mubr.f32.mxu0 %v451
        %743 = vmatmul.mubr.f32.gmra.mrb[0].mxu0 %v450
        %v744 = vpop.f32.mrb[0].mxu0
        %v745 = vadd.f32 0.0, %v744
        %v746 = vpop.f32.mrb[0].mxu0
        %v747 = vadd.f32 0.0, %v746
        %748 = vmatprep.mubr.f32.mxu0 %v453
        %749 = vmatmul.mubr.f32.gmra.mrb[0].mxu0 %v452
        %v750 = vpop.f32.mrb[0].mxu0
        %v751 = vadd.f32 0.0, %v750
        %v752 = vpop.f32.mrb[0].mxu0
        %v753 = vadd.f32 0.0, %v752
        %754 = vmatprep.mubr.f32.mxu0 %v455
        %755 = vmatmul.mubr.f32.gmra.mrb[0].mxu0 %v454
        %v756 = vpop.f32.mrb[0].mxu0
        %v757 = vadd.f32 0.0, %v756
        %v758 = vpop.f32.mrb[0].mxu0
        %v759 = vadd.f32 0.0, %v758
        %760 = vmatprep.mubr.f32.mxu0 %v457
        %761 = vmatmul.mubr.f32.gmra.mrb[0].mxu0 %v456
        %v762 = vpop.f32.mrb[0].mxu0
        %v763 = vadd.f32 0.0, %v762
        %v764 = vpop.f32.mrb[0].mxu0
        %v765 = vadd.f32 0.0, %v764
        %766 = vmatprep.mubr.f32.mxu0 %v459
        %767 = vmatmul.mubr.f32.gmra.mrb[0].mxu0 %v458
        %v768 = vpop.f32.mrb[0].mxu0
        %v769 = vadd.f32 0.0, %v768
        %v770 = vpop.f32.mrb[0].mxu0
        %v771 = vadd.f32 0.0, %v770
        %772 = vmatprep.mubr.f32.mxu0 %v461
        %773 = vmatmul.mubr.f32.gmra.mrb[0].mxu0 %v460
        %v774 = vpop.f32.mrb[0].mxu0
        %v775 = vadd.f32 0.0, %v774
        %v776 = vpop.f32.mrb[0].mxu0
        %v777 = vadd.f32 0.0, %v776
        %778 = vmatprep.mubr.f32.mxu0 %v463
        %779 = vmatmul.mubr.f32.gmra.mrb[0].mxu0 %v462
        %v780 = vpop.f32.mrb[0].mxu0
        %v781 = vadd.f32 0.0, %v780
        %v782 = vpop.f32.mrb[0].mxu0
        %v783 = vadd.f32 0.0, %v782
        %784 = vdwg.mxu0
        %v785 = vadd.f32 %v336, %v595
        %v786 = vadd.f32 %v337, %v597
        %v787 = vadd.f32 %v338, %v601
        %v788 = vadd.f32 %v339, %v603
        %v789 = vadd.f32 %v340, %v607
        %v790 = vadd.f32 %v341, %v609
        %v791 = vadd.f32 %v342, %v613
        %v792 = vadd.f32 %v343, %v615
        %v793 = vadd.f32 %v344, %v619
        %v794 = vadd.f32 %v345, %v621
        %v795 = vadd.f32 %v346, %v625
        %v796 = vadd.f32 %v347, %v627
        %v797 = vadd.f32 %v348, %v631
        %v798 = vadd.f32 %v349, %v633
        %v799 = vadd.f32 %v350, %v637
        %v800 = vadd.f32 %v351, %v639
        %v801 = vadd.f32 %v352, %v643
        %v802 = vadd.f32 %v353, %v645
        %v803 = vadd.f32 %v354, %v649
        %v804 = vadd.f32 %v355, %v651
        %v805 = vadd.f32 %v356, %v655
        %v806 = vadd.f32 %v357, %v657
        %v807 = vadd.f32 %v358, %v661
        %v808 = vadd.f32 %v359, %v663
        %v809 = vadd.f32 %v360, %v667
        %v810 = vadd.f32 %v361, %v669
        %v811 = vadd.f32 %v362, %v673
        %v812 = vadd.f32 %v363, %v675
        %v813 = vadd.f32 %v364, %v679
        %v814 = vadd.f32 %v365, %v681
        %v815 = vadd.f32 %v366, %v685
        %v816 = vadd.f32 %v367, %v687
        %v817 = vadd.f32 %v368, %v691
        %v818 = vadd.f32 %v369, %v693
        %v819 = vadd.f32 %v370, %v697
        %v820 = vadd.f32 %v371, %v699
        %v821 = vadd.f32 %v372, %v703
        %v822 = vadd.f32 %v373, %v705
        %v823 = vadd.f32 %v374, %v709
        %v824 = vadd.f32 %v375, %v711
        %v825 = vadd.f32 %v376, %v715
        %v826 = vadd.f32 %v377, %v717
        %v827 = vadd.f32 %v378, %v721
        %v828 = vadd.f32 %v379, %v723
        %v829 = vadd.f32 %v380, %v727
        %v830 = vadd.f32 %v381, %v729
        %v831 = vadd.f32 %v382, %v733
        %v832 = vadd.f32 %v383, %v735
        %v833 = vadd.f32 %v384, %v739
        %v834 = vadd.f32 %v385, %v741
        %v835 = vadd.f32 %v386, %v745
        %v836 = vadd.f32 %v387, %v747
        %v837 = vadd.f32 %v388, %v751
        %v838 = vadd.f32 %v389, %v753
        %v839 = vadd.f32 %v390, %v757
        %v840 = vadd.f32 %v391, %v759
        %v841 = vadd.f32 %v392, %v763
        %v842 = vadd.f32 %v393, %v765
        %v843 = vadd.f32 %v394, %v769
        %v844 = vadd.f32 %v395, %v771
        %v845 = vadd.f32 %v396, %v775
        %v846 = vadd.f32 %v397, %v777
        %v847 = vadd.f32 %v398, %v781
        %v848 = vadd.f32 %v399, %v783
        %849 = vst [vmem:[#allocation2] sm:$0xff] %v785
        %850 = vst [vmem:[#allocation2 + $0x8] sm:$0xff] %v786
        %851 = vst [vmem:[#allocation2 + $0x10] sm:$0xff] %v787
        %852 = vst [vmem:[#allocation2 + $0x18] sm:$0xff] %v788
        %853 = vst [vmem:[#allocation2 + $0x20] sm:$0xff] %v789
        %854 = vst [vmem:[#allocation2 + $0x28] sm:$0xff] %v790
        %855 = vst [vmem:[#allocation2 + $0x30] sm:$0xff] %v791
        %856 = vst [vmem:[#allocation2 + $0x38] sm:$0xff] %v792
        %857 = vst [vmem:[#allocation2 + $0x40] sm:$0xff] %v793
        %858 = vst [vmem:[#allocation2 + $0x48] sm:$0xff] %v794
        %859 = vst [vmem:[#allocation2 + $0x50] sm:$0xff] %v795
        %860 = vst [vmem:[#allocation2 + $0x58] sm:$0xff] %v796
        %861 = vst [vmem:[#allocation2 + $0x60] sm:$0xff] %v797
        %862 = vst [vmem:[#allocation2 + $0x68] sm:$0xff] %v798
        %863 = vst [vmem:[#allocation2 + $0x70] sm:$0xff] %v799
        %864 = vst [vmem:[#allocation2 + $0x78] sm:$0xff] %v800
        %865 = vst [vmem:[#allocation2 + $0x80] sm:$0xff] %v801
        %866 = vst [vmem:[#allocation2 + $0x88] sm:$0xff] %v802
        %867 = vst [vmem:[#allocation2 + $0x90] sm:$0xff] %v803
        %868 = vst [vmem:[#allocation2 + $0x98] sm:$0xff] %v804
        %869 = vst [vmem:[#allocation2 + $0xa0] sm:$0xff] %v805
        %870 = vst [vmem:[#allocation2 + $0xa8] sm:$0xff] %v806
        %871 = vst [vmem:[#allocation2 + $0xb0] sm:$0xff] %v807
        %872 = vst [vmem:[#allocation2 + $0xb8] sm:$0xff] %v808
        %873 = vst [vmem:[#allocation2 + $0xc0] sm:$0xff] %v809
        %874 = vst [vmem:[#allocation2 + $0xc8] sm:$0xff] %v810
        %875 = vst [vmem:[#allocation2 + $0xd0] sm:$0xff] %v811
        %876 = vst [vmem:[#allocation2 + $0xd8] sm:$0xff] %v812
        %877 = vst [vmem:[#allocation2 + $0xe0] sm:$0xff] %v813
        %878 = vst [vmem:[#allocation2 + $0xe8] sm:$0xff] %v814
        %879 = vst [vmem:[#allocation2 + $0xf0] sm:$0xff] %v815
        %880 = vst [vmem:[#allocation2 + $0xf8] sm:$0xff] %v816
        %881 = vst [vmem:[#allocation2 + $0x100] sm:$0xff] %v817
        %882 = vst [vmem:[#allocation2 + $0x108] sm:$0xff] %v818
        %883 = vst [vmem:[#allocation2 + $0x110] sm:$0xff] %v819
        %884 = vst [vmem:[#allocation2 + $0x118] sm:$0xff] %v820
        %885 = vst [vmem:[#allocation2 + $0x120] sm:$0xff] %v821
        %886 = vst [vmem:[#allocation2 + $0x128] sm:$0xff] %v822
        %887 = vst [vmem:[#allocation2 + $0x130] sm:$0xff] %v823
        %888 = vst [vmem:[#allocation2 + $0x138] sm:$0xff] %v824
        %889 = vst [vmem:[#allocation2 + $0x140] sm:$0xff] %v825
        %890 = vst [vmem:[#allocation2 + $0x148] sm:$0xff] %v826
        %891 = vst [vmem:[#allocation2 + $0x150] sm:$0xff] %v827
        %892 = vst [vmem:[#allocation2 + $0x158] sm:$0xff] %v828
        %893 = vst [vmem:[#allocation2 + $0x160] sm:$0xff] %v829
        %894 = vst [vmem:[#allocation2 + $0x168] sm:$0xff] %v830
        %895 = vst [vmem:[#allocation2 + $0x170] sm:$0xff] %v831
        %896 = vst [vmem:[#allocation2 + $0x178] sm:$0xff] %v832
        %897 = vst [vmem:[#allocation2 + $0x180] sm:$0xff] %v833
        %898 = vst [vmem:[#allocation2 + $0x188] sm:$0xff] %v834
        %899 = vst [vmem:[#allocation2 + $0x190] sm:$0xff] %v835
        %900 = vst [vmem:[#allocation2 + $0x198] sm:$0xff] %v836
        %901 = vst [vmem:[#allocation2 + $0x1a0] sm:$0xff] %v837
        %902 = vst [vmem:[#allocation2 + $0x1a8] sm:$0xff] %v838
        %903 = vst [vmem:[#allocation2 + $0x1b0] sm:$0xff] %v839
        %904 = vst [vmem:[#allocation2 + $0x1b8] sm:$0xff] %v840
        %905 = vst [vmem:[#allocation2 + $0x1c0] sm:$0xff] %v841
        %906 = vst [vmem:[#allocation2 + $0x1c8] sm:$0xff] %v842
        %907 = vst [vmem:[#allocation2 + $0x1d0] sm:$0xff] %v843
        %908 = vst [vmem:[#allocation2 + $0x1d8] sm:$0xff] %v844
        %909 = vst [vmem:[#allocation2 + $0x1e0] sm:$0xff] %v845
        %910 = vst [vmem:[#allocation2 + $0x1e8] sm:$0xff] %v846
        %911 = vst [vmem:[#allocation2 + $0x1f0] sm:$0xff] %v847
        %912 = vst [vmem:[#allocation2 + $0x1f8] sm:$0xff] %v848
        // Predicated region
        $region45: #{tpu_custom_call.1} parent=31 // pred_check
          %p913 = pneg %p268
        $region46: #{tpu_custom_call.1} parent=31 // pred_check_branch
          %915 = sbr.rel (%p913) target = $region48
        $region47: #{tpu_custom_call.1} parent=31 // pred_region
          %v916 = vld [vmem:[#allocation2] sm:$0xff]
          %v917 = vld [vmem:[#allocation2 + $0x8] sm:$0xff]
          %v918 = vld [vmem:[#allocation2 + $0x10] sm:$0xff]
          %v919 = vld [vmem:[#allocation2 + $0x18] sm:$0xff]
          %v920 = vld [vmem:[#allocation2 + $0x20] sm:$0xff]
          %v921 = vld [vmem:[#allocation2 + $0x28] sm:$0xff]
          %v922 = vld [vmem:[#allocation2 + $0x30] sm:$0xff]
          %v923 = vld [vmem:[#allocation2 + $0x38] sm:$0xff]
          %v924 = vld [vmem:[#allocation2 + $0x40] sm:$0xff]
          %v925 = vld [vmem:[#allocation2 + $0x48] sm:$0xff]
          %v926 = vld [vmem:[#allocation2 + $0x50] sm:$0xff]
          %v927 = vld [vmem:[#allocation2 + $0x58] sm:$0xff]
          %v928 = vld [vmem:[#allocation2 + $0x60] sm:$0xff]
          %v929 = vld [vmem:[#allocation2 + $0x68] sm:$0xff]
          %v930 = vld [vmem:[#allocation2 + $0x70] sm:$0xff]
          %v931 = vld [vmem:[#allocation2 + $0x78] sm:$0xff]
          %v932 = vld [vmem:[#allocation2 + $0x80] sm:$0xff]
          %v933 = vld [vmem:[#allocation2 + $0x88] sm:$0xff]
          %v934 = vld [vmem:[#allocation2 + $0x90] sm:$0xff]
          %v935 = vld [vmem:[#allocation2 + $0x98] sm:$0xff]
          %v936 = vld [vmem:[#allocation2 + $0xa0] sm:$0xff]
          %v937 = vld [vmem:[#allocation2 + $0xa8] sm:$0xff]
          %v938 = vld [vmem:[#allocation2 + $0xb0] sm:$0xff]
          %v939 = vld [vmem:[#allocation2 + $0xb8] sm:$0xff]
          %v940 = vld [vmem:[#allocation2 + $0xc0] sm:$0xff]
          %v941 = vld [vmem:[#allocation2 + $0xc8] sm:$0xff]
          %v942 = vld [vmem:[#allocation2 + $0xd0] sm:$0xff]
          %v943 = vld [vmem:[#allocation2 + $0xd8] sm:$0xff]
          %v944 = vld [vmem:[#allocation2 + $0xe0] sm:$0xff]
          %v945 = vld [vmem:[#allocation2 + $0xe8] sm:$0xff]
          %v946 = vld [vmem:[#allocation2 + $0xf0] sm:$0xff]
          %v947 = vld [vmem:[#allocation2 + $0xf8] sm:$0xff]
          %v948 = vld [vmem:[#allocation2 + $0x100] sm:$0xff]
          %v949 = vld [vmem:[#allocation2 + $0x108] sm:$0xff]
          %v950 = vld [vmem:[#allocation2 + $0x110] sm:$0xff]
          %v951 = vld [vmem:[#allocation2 + $0x118] sm:$0xff]
          %v952 = vld [vmem:[#allocation2 + $0x120] sm:$0xff]
          %v953 = vld [vmem:[#allocation2 + $0x128] sm:$0xff]
          %v954 = vld [vmem:[#allocation2 + $0x130] sm:$0xff]
          %v955 = vld [vmem:[#allocation2 + $0x138] sm:$0xff]
          %v956 = vld [vmem:[#allocation2 + $0x140] sm:$0xff]
          %v957 = vld [vmem:[#allocation2 + $0x148] sm:$0xff]
          %v958 = vld [vmem:[#allocation2 + $0x150] sm:$0xff]
          %v959 = vld [vmem:[#allocation2 + $0x158] sm:$0xff]
          %v960 = vld [vmem:[#allocation2 + $0x160] sm:$0xff]
          %v961 = vld [vmem:[#allocation2 + $0x168] sm:$0xff]
          %v962 = vld [vmem:[#allocation2 + $0x170] sm:$0xff]
          %v963 = vld [vmem:[#allocation2 + $0x178] sm:$0xff]
          %v964 = vld [vmem:[#allocation2 + $0x180] sm:$0xff]
          %v965 = vld [vmem:[#allocation2 + $0x188] sm:$0xff]
          %v966 = vld [vmem:[#allocation2 + $0x190] sm:$0xff]
          %v967 = vld [vmem:[#allocation2 + $0x198] sm:$0xff]
          %v968 = vld [vmem:[#allocation2 + $0x1a0] sm:$0xff]
          %v969 = vld [vmem:[#allocation2 + $0x1a8] sm:$0xff]
          %v970 = vld [vmem:[#allocation2 + $0x1b0] sm:$0xff]
          %v971 = vld [vmem:[#allocation2 + $0x1b8] sm:$0xff]
          %v972 = vld [vmem:[#allocation2 + $0x1c0] sm:$0xff]
          %v973 = vld [vmem:[#allocation2 + $0x1c8] sm:$0xff]
          %v974 = vld [vmem:[#allocation2 + $0x1d0] sm:$0xff]
          %v975 = vld [vmem:[#allocation2 + $0x1d8] sm:$0xff]
          %v976 = vld [vmem:[#allocation2 + $0x1e0] sm:$0xff]
          %v977 = vld [vmem:[#allocation2 + $0x1e8] sm:$0xff]
          %v978 = vld [vmem:[#allocation2 + $0x1f0] sm:$0xff]
          %v979 = vld [vmem:[#allocation2 + $0x1f8] sm:$0xff]
          %v980 = vld [vmem:[%s264] sm:$0x3]
          %v982 = vlaneseq
          %v983 = vshrl.u32 %v982, 7
          %v984 = vsub.s32 0, %v983
          %v985 = vrot.slane %v980, %v984
          %v986 = vlaneseq
          %v987 = vshrl.u32 %v986, 7
          %v988 = vsub.s32 1, %v987
          %v989 = vrot.slane %v980, %v988
          %v992 = vadd.f32 %v916, %v985
          %v993 = vadd.f32 %v917, %v989
          %v994 = vadd.f32 %v918, %v985
          %v995 = vadd.f32 %v919, %v989
          %v996 = vadd.f32 %v920, %v985
          %v997 = vadd.f32 %v921, %v989
          %v998 = vadd.f32 %v922, %v985
          %v999 = vadd.f32 %v923, %v989
          %v1000 = vadd.f32 %v924, %v985
          %v1001 = vadd.f32 %v925, %v989
          %v1002 = vadd.f32 %v926, %v985
          %v1003 = vadd.f32 %v927, %v989
          %v1004 = vadd.f32 %v928, %v985
          %v1005 = vadd.f32 %v929, %v989
          %v1006 = vadd.f32 %v930, %v985
          %v1007 = vadd.f32 %v931, %v989
          %v1008 = vadd.f32 %v932, %v985
          %v1009 = vadd.f32 %v933, %v989
          %v1010 = vadd.f32 %v934, %v985
          %v1011 = vadd.f32 %v935, %v989
          %v1012 = vadd.f32 %v936, %v985
          %v1013 = vadd.f32 %v937, %v989
          %v1014 = vadd.f32 %v938, %v985
          %v1015 = vadd.f32 %v939, %v989
          %v1016 = vadd.f32 %v940, %v985
          %v1017 = vadd.f32 %v941, %v989
          %v1018 = vadd.f32 %v942, %v985
          %v1019 = vadd.f32 %v943, %v989
          %v1020 = vadd.f32 %v944, %v985
          %v1021 = vadd.f32 %v945, %v989
          %v1022 = vadd.f32 %v946, %v985
          %v1023 = vadd.f32 %v947, %v989
          %v1024 = vadd.f32 %v948, %v985
          %v1025 = vadd.f32 %v949, %v989
          %v1026 = vadd.f32 %v950, %v985
          %v1027 = vadd.f32 %v951, %v989
          %v1028 = vadd.f32 %v952, %v985
          %v1029 = vadd.f32 %v953, %v989
          %v1030 = vadd.f32 %v954, %v985
          %v1031 = vadd.f32 %v955, %v989
          %v1032 = vadd.f32 %v956, %v985
          %v1033 = vadd.f32 %v957, %v989
          %v1034 = vadd.f32 %v958, %v985
          %v1035 = vadd.f32 %v959, %v989
          %v1036 = vadd.f32 %v960, %v985
          %v1037 = vadd.f32 %v961, %v989
          %v1038 = vadd.f32 %v962, %v985
          %v1039 = vadd.f32 %v963, %v989
          %v1040 = vadd.f32 %v964, %v985
          %v1041 = vadd.f32 %v965, %v989
          %v1042 = vadd.f32 %v966, %v985
          %v1043 = vadd.f32 %v967, %v989
          %v1044 = vadd.f32 %v968, %v985
          %v1045 = vadd.f32 %v969, %v989
          %v1046 = vadd.f32 %v970, %v985
          %v1047 = vadd.f32 %v971, %v989
          %v1048 = vadd.f32 %v972, %v985
          %v1049 = vadd.f32 %v973, %v989
          %v1050 = vadd.f32 %v974, %v985
          %v1051 = vadd.f32 %v975, %v989
          %v1052 = vadd.f32 %v976, %v985
          %v1053 = vadd.f32 %v977, %v989
          %v1054 = vadd.f32 %v978, %v985
          %v1055 = vadd.f32 %v979, %v989
          %1056 = vst [vmem:[%s256] sm:$0xff] %v992
          %1057 = vst [vmem:[%s256 + $0x8] sm:$0xff] %v993
          %1058 = vst [vmem:[%s256 + $0x10] sm:$0xff] %v994
          %1059 = vst [vmem:[%s256 + $0x18] sm:$0xff] %v995
          %1060 = vst [vmem:[%s256 + $0x20] sm:$0xff] %v996
          %1061 = vst [vmem:[%s256 + $0x28] sm:$0xff] %v997
          %1062 = vst [vmem:[%s256 + $0x30] sm:$0xff] %v998
          %1063 = vst [vmem:[%s256 + $0x38] sm:$0xff] %v999
          %1064 = vst [vmem:[%s256 + $0x40] sm:$0xff] %v1000
          %1065 = vst [vmem:[%s256 + $0x48] sm:$0xff] %v1001
          %1066 = vst [vmem:[%s256 + $0x50] sm:$0xff] %v1002
          %1067 = vst [vmem:[%s256 + $0x58] sm:$0xff] %v1003
          %1068 = vst [vmem:[%s256 + $0x60] sm:$0xff] %v1004
          %1069 = vst [vmem:[%s256 + $0x68] sm:$0xff] %v1005
          %1070 = vst [vmem:[%s256 + $0x70] sm:$0xff] %v1006
          %1071 = vst [vmem:[%s256 + $0x78] sm:$0xff] %v1007
          %1072 = vst [vmem:[%s256 + $0x80] sm:$0xff] %v1008
          %1073 = vst [vmem:[%s256 + $0x88] sm:$0xff] %v1009
          %1074 = vst [vmem:[%s256 + $0x90] sm:$0xff] %v1010
          %1075 = vst [vmem:[%s256 + $0x98] sm:$0xff] %v1011
          %1076 = vst [vmem:[%s256 + $0xa0] sm:$0xff] %v1012
          %1077 = vst [vmem:[%s256 + $0xa8] sm:$0xff] %v1013
          %1078 = vst [vmem:[%s256 + $0xb0] sm:$0xff] %v1014
          %1079 = vst [vmem:[%s256 + $0xb8] sm:$0xff] %v1015
          %1080 = vst [vmem:[%s256 + $0xc0] sm:$0xff] %v1016
          %1081 = vst [vmem:[%s256 + $0xc8] sm:$0xff] %v1017
          %1082 = vst [vmem:[%s256 + $0xd0] sm:$0xff] %v1018
          %1083 = vst [vmem:[%s256 + $0xd8] sm:$0xff] %v1019
          %1084 = vst [vmem:[%s256 + $0xe0] sm:$0xff] %v1020
          %1085 = vst [vmem:[%s256 + $0xe8] sm:$0xff] %v1021
          %1086 = vst [vmem:[%s256 + $0xf0] sm:$0xff] %v1022
          %1087 = vst [vmem:[%s256 + $0xf8] sm:$0xff] %v1023
          %1088 = vst [vmem:[%s256 + $0x100] sm:$0xff] %v1024
          %1089 = vst [vmem:[%s256 + $0x108] sm:$0xff] %v1025
          %1090 = vst [vmem:[%s256 + $0x110] sm:$0xff] %v1026
          %1091 = vst [vmem:[%s256 + $0x118] sm:$0xff] %v1027
          %1092 = vst [vmem:[%s256 + $0x120] sm:$0xff] %v1028
          %1093 = vst [vmem:[%s256 + $0x128] sm:$0xff] %v1029
          %1094 = vst [vmem:[%s256 + $0x130] sm:$0xff] %v1030
          %1095 = vst [vmem:[%s256 + $0x138] sm:$0xff] %v1031
          %1096 = vst [vmem:[%s256 + $0x140] sm:$0xff] %v1032
          %1097 = vst [vmem:[%s256 + $0x148] sm:$0xff] %v1033
          %1098 = vst [vmem:[%s256 + $0x150] sm:$0xff] %v1034
          %1099 = vst [vmem:[%s256 + $0x158] sm:$0xff] %v1035
          %1100 = vst [vmem:[%s256 + $0x160] sm:$0xff] %v1036
          %1101 = vst [vmem:[%s256 + $0x168] sm:$0xff] %v1037
          %1102 = vst [vmem:[%s256 + $0x170] sm:$0xff] %v1038
          %1103 = vst [vmem:[%s256 + $0x178] sm:$0xff] %v1039
          %1104 = vst [vmem:[%s256 + $0x180] sm:$0xff] %v1040
          %1105 = vst [vmem:[%s256 + $0x188] sm:$0xff] %v1041
          %1106 = vst [vmem:[%s256 + $0x190] sm:$0xff] %v1042
          %1107 = vst [vmem:[%s256 + $0x198] sm:$0xff] %v1043
          %1108 = vst [vmem:[%s256 + $0x1a0] sm:$0xff] %v1044
          %1109 = vst [vmem:[%s256 + $0x1a8] sm:$0xff] %v1045
          %1110 = vst [vmem:[%s256 + $0x1b0] sm:$0xff] %v1046
          %1111 = vst [vmem:[%s256 + $0x1b8] sm:$0xff] %v1047
          %1112 = vst [vmem:[%s256 + $0x1c0] sm:$0xff] %v1048
          %1113 = vst [vmem:[%s256 + $0x1c8] sm:$0xff] %v1049
          %1114 = vst [vmem:[%s256 + $0x1d0] sm:$0xff] %v1050
          %1115 = vst [vmem:[%s256 + $0x1d8] sm:$0xff] %v1051
          %1116 = vst [vmem:[%s256 + $0x1e0] sm:$0xff] %v1052
          %1117 = vst [vmem:[%s256 + $0x1e8] sm:$0xff] %v1053
          %1118 = vst [vmem:[%s256 + $0x1f0] sm:$0xff] %v1054
          %1119 = vst [vmem:[%s256 + $0x1f8] sm:$0xff] %v1055
        $region48: #{tpu_custom_call.1} parent=31 // pred_fallthru
          _
        %s1120 = sand.u32 %s132, 1
        %s1121 = scalar_lea.sflag [#allocation5], %s1120
        %s1122 = sand.u32 %s132, 1
        %s1123 = smul.addr %s1122, 512
        %s1124 = scalar_lea.vmem [#allocation8], %s1123
        // Predicated region
        $region49: #{tpu_custom_call.1} parent=31 // pred_check
          %p1125 = pneg %p142
        $region50: #{tpu_custom_call.1} parent=31 // pred_check_branch
          %1127 = sbr.rel (%p1125) target = $region52
        $region51: #{tpu_custom_call.1} parent=31 // pred_region
          %s1128 = smul.u32 32, %s26
          %s1129 = smul.u32 2, %s27
          %s1131 = ssub.s32 8192, 8192
          %1132 = vsyncadd %s1121, %s1131
          %s1133 = smul.addr %s1128, 6
          %s1134 = sadd.s32 %s1129, %s1133
          %s1135 = smul.addr %s1134, 128
          %s1136 = scalar_lea.hbm %s3, %s1135
          %s1137 = sshll.u32 %s1124, 4
          %s1138 = int_to_ptr.vmem [resolvable:$true] %s1137
          %1143 = dma.vmem_to_hbm [thread:$0]  %s1138, 8192, %s1136, %s1121, 256, 768, 16
        $region52: #{tpu_custom_call.1} parent=31 // pred_fallthru
          _
      $region32: #{tpu_custom_call.1} parent=5 // pred_fallthru
        _
      %p1144 = scmp.le.s32.totalorder 2, %s16
      // Predicated region
      $region53: #{tpu_custom_call.1} parent=5 // pred_check
        %p1145 = pneg %p1144
      $region54: #{tpu_custom_call.1} parent=5 // pred_check_branch
        %1147 = sbr.rel (%p1145) target = $region56
      $region55: #{tpu_custom_call.1} parent=5 // pred_region
        %s1148 = ssub.s32 %s16, 2
        // Predicated region
        $region57: #{tpu_custom_call.1} parent=55 // pred_check
          %p1149 = pneg %p148
        $region58: #{tpu_custom_call.1} parent=55 // pred_check_branch
          %1151 = sbr.rel (%p1149) target = $region60
        $region59: #{tpu_custom_call.1} parent=55 // pred_region
          %s1152 = sand.u32 %s133, 1
          %s1153 = scalar_lea.sflag [#allocation5], %s1152
          %s1154 = sand.u32 %s133, 1
          %s1155 = smul.addr %s1154, 512
          %s1156 = scalar_lea.vmem [#allocation8], %s1155
          %1157 = dma.done %s1153, 8192
        $region60: #{tpu_custom_call.1} parent=55 // pred_fallthru
          _
      $region56: #{tpu_custom_call.1} parent=5 // pred_fallthru
        _
    $region6: #{tpu_custom_call.1} parent=1 // loop_footer
      %s20 = sadd.s32 1, %s16
    $region7: #{tpu_custom_call.1} parent=1 // loop_footer_branch
      %15 = sbr.rel target = $region3
    $region8: #{tpu_custom_call.1} parent=1 // loop_exit
      _
    %1158 = vsyncpa [#allocation4], 1
    %s1159 = scalar_lea.sflag [#allocation4], 1
    %1160 = vsyncpa %s1159, 1
    %1161 = vsyncpa [#allocation7], 1
    %s1162 = scalar_lea.sflag [#allocation7], 1
    %1163 = vsyncpa %s1162, 1
    %1164 = vsyncpa [#allocation5], 1
    %s1165 = scalar_lea.sflag [#allocation5], 1
    %1166 = vsyncpa %s1165, 1

</llo_original>
